<compile_context>
chip_gen: v6e
topology: v6e:2x2x1
jax: 0.10.0
libtpu: 0.0.40
codegen_flags: <defaults>
</compile_context>

<pallas_src>
import functools

import jax
import jax.numpy as jnp
from jax.experimental import pallas as pl
from jax.experimental.pallas import tpu as pltpu

_LANE = 128
_SUBLANE = 8


def _round_up(n, m):
    return ((n + m - 1) // m) * m


def _device_kind():
    try:
        return jax.devices()[0].device_kind.lower()
    except Exception:
        return ""


def _num_tensorcores(kind):
    # v7x exposes 2 TensorCores per chip; everything older used here has 1.
    return 2 if ("v7" in kind or "7x" in kind) else 1


def _supports_bf16_vpu(kind):
    # v6e / v7x have bf16 VALUs; keep f32 elementwise on v5e and unknown chips.
    return ("v6" in kind) or ("v7" in kind) or ("7x" in kind)


def _vmem_capacity_bytes():
    try:
        return int(pltpu.get_tpu_info().vmem_capacity_bytes)
    except Exception:
        return 64 * 2**20  # conservative (v7x per-TC capacity)


def _mlp_kernel(x_ref, w1_ref, wh_ref, wo_ref, bh_ref, bo_ref, o_ref, *,
                n_mid, bf16_elementwise):
    """Fused forward: Linear+ReLU x5, then final Linear; everything VMEM-resident.

    x_ref:  [tile, in_dim]     bf16
    w1_ref: [in_dim, Wp]       bf16
    wh_ref: [n_mid, Wp, Wp]    bf16  (packed hidden weights, layers 2..5)
    wo_ref: [Wp, NCp]          bf16
    bh_ref: [8, Wp]            f32   (rows 0..n_mid used: biases of layers 1..5)
    bo_ref: [1, NCp]           f32
    o_ref:  [tile, NCp]        f32
    """

    def bias_relu(acc_f32, b_f32):
        if bf16_elementwise:
            return jnp.maximum(acc_f32.astype(jnp.bfloat16)
                               + b_f32.astype(jnp.bfloat16), 0.0)
        return jnp.maximum(acc_f32 + b_f32, 0.0).astype(jnp.bfloat16)

    # Layer 1: bf16 x bf16 -> f32 accumulation on the MXU.
    acc = jnp.dot(x_ref[...], w1_ref[...], preferred_element_type=jnp.float32)
    h = bias_relu(acc, bh_ref[0:1, :])

    # Layers 2..(1+n_mid): packed square weights; static (unrolled) loop.
    for li in range(n_mid):
        acc = jnp.dot(h, wh_ref[li], preferred_element_type=jnp.float32)
        h = bias_relu(acc, bh_ref[li + 1:li + 2, :])

    # Output layer: no ReLU, f32 bias-add, f32 store.
    acc = jnp.dot(h, wo_ref[...], preferred_element_type=jnp.float32)
    o_ref[...] = (acc + bo_ref[...]).astype(o_ref.dtype)


def mlp_forward(x, params, *, max_batch_tile=4096, use_bf16_elementwise=None,
                num_tensorcores=None):
    """x: [B, input_size] f32. params: list of 6 (W_t [in, out], b [out]) f32."""
    B, in_dim = x.shape
    n_layers = len(params)
    n_mid = n_layers - 2                     # the width x width hidden layers (ff2..ff5)
    width = params[1][0].shape[0]
    num_classes = params[-1][0].shape[1]

    # Shape assumptions behind the weight packing.
    assert params[0][0].shape == (in_dim, width)
    for (w, _) in params[1:-1]:
        assert w.shape == (width, width)
    assert params[-1][0].shape[0] == width

    kind = _device_kind()
    if use_bf16_elementwise is None:
        use_bf16_elementwise = _supports_bf16_vpu(kind)
    if num_tensorcores is None:
        num_tensorcores = _num_tensorcores(kind)

    # Lane-dense padding of the hidden width / num_classes.
    Wp = _round_up(width, _LANE)
    NCp = _round_up(num_classes, _LANE)

    # Batch tiling: one maximal tile per TensorCore; more grid steps only if the tile
    # would exceed max_batch_tile.
    B_8 = _round_up(B, _SUBLANE)
    batch_tile = _round_up(pl.cdiv(B_8, num_tensorcores), _SUBLANE)
    batch_tile = min(batch_tile, _round_up(max_batch_tile, _SUBLANE))
    grid_n = pl.cdiv(B_8, batch_tile)
    B_p = grid_n * batch_tile

    # Inputs: bf16 x (half the DMA bytes), bf16 weights, f32 biases; all zero-padded.
    x_p = jnp.pad(x, ((0, B_p - B), (0, 0))).astype(jnp.bfloat16)

    (w1, _), (wo, bo) = params[0], params[-1]
    w1_p = jnp.pad(w1.astype(jnp.bfloat16), ((0, 0), (0, Wp - width)))
    wo_p = jnp.pad(wo.astype(jnp.bfloat16), ((0, Wp - width), (0, NCp - num_classes)))
    wh_p = jnp.stack([jnp.pad(w.astype(jnp.bfloat16),
                              ((0, Wp - width), (0, Wp - width)))
                      for (w, _) in params[1:-1]])                  # [n_mid, Wp, Wp]

    bh = jnp.stack([b.astype(jnp.float32) for (_, b) in params[:-1]])   # [n_mid+1, width]
    bh_rows = _round_up(n_mid + 1, _SUBLANE)
    bh_p = jnp.pad(bh, ((0, bh_rows - (n_mid + 1)), (0, Wp - width)))   # [8, Wp]
    bo_p = jnp.pad(bo.astype(jnp.float32), (0, NCp - num_classes)).reshape(1, NCp)

    in_specs = [
        pl.BlockSpec((batch_tile, in_dim), lambda i: (i, 0)),
        pl.BlockSpec((in_dim, Wp), lambda i: (0, 0)),
        pl.BlockSpec((n_mid, Wp, Wp), lambda i: (0, 0, 0)),
        pl.BlockSpec((Wp, NCp), lambda i: (0, 0)),
        pl.BlockSpec((bh_rows, Wp), lambda i: (0, 0)),
        pl.BlockSpec((1, NCp), lambda i: (0, 0)),
    ]
    out_spec = pl.BlockSpec((batch_tile, NCp), lambda i: (i, 0))

    # Advisory cost estimate (padded problem) for XLA's scheduler.
    flops = 2 * B_p * (in_dim * Wp + n_mid * Wp * Wp + Wp * NCp)
    bytes_accessed = (
        x_p.size * 2
        + (w1_p.size + wh_p.size + wo_p.size) * 2
        + (bh_p.size + bo_p.size) * 4
        + B_p * NCp * 4
    )
    cost = pl.CostEstimate(flops=flops, transcendentals=0,
                           bytes_accessed=bytes_accessed)

    # VMEM budget: double-buffered tiles + weights + live-activation headroom,
    # capped at half the physical VMEM of the current generation.
    buf_bytes = (
        2 * batch_tile * in_dim * 2                      # bf16 x tile, double-buffered
        + 2 * batch_tile * NCp * 4                       # f32 out tile, double-buffered
        + 2 * (w1_p.size + wh_p.size + wo_p.size) * 2    # bf16 weights
        + 2 * (bh_p.size + bo_p.size) * 4                # f32 biases
        + 4 * batch_tile * Wp * 4                        # live activation headroom
    )
    vmem_cap = _vmem_capacity_bytes()
    vmem_limit = int(min(max(16 * 2**20, 2 * buf_bytes), vmem_cap // 2))

    kernel = functools.partial(_mlp_kernel, n_mid=n_mid,
                               bf16_elementwise=use_bf16_elementwise)

    out_p = pl.pallas_call(
        kernel,
        out_shape=jax.ShapeDtypeStruct((B_p, NCp), jnp.float32),
        grid_spec=pltpu.PrefetchScalarGridSpec(
            num_scalar_prefetch=0,
            grid=(grid_n,),
            in_specs=in_specs,
            out_specs=out_spec,
        ),
        compiler_params=pltpu.CompilerParams(
            dimension_semantics=("parallel",),
            vmem_limit_bytes=vmem_limit,
        ),
        cost_estimate=cost,
    )(x_p, w1_p, wh_p, wo_p, bh_p, bo_p)

    return out_p[:B, :num_classes].astype(x.dtype)


def init_mlp_params(key, input_size, width=64, num_classes=10):
    """Deterministic init mimicking nn.Linear's U(-1/sqrt(fan_in), 1/sqrt(fan_in)).
    Weights stored transposed: [in_features, out_features]."""
    dims = [input_size, width, width, width, width, width, num_classes]
    params = []
    for i in range(6):
        key, kw, kb = jax.random.split(key, 3)
        fan_in, fan_out = dims[i], dims[i + 1]
        bound = 1.0 / jnp.sqrt(jnp.float32(fan_in))
        w_t = jax.random.uniform(kw, (fan_in, fan_out), jnp.float32, -bound, bound)
        b = jax.random.uniform(kb, (fan_out,), jnp.float32, -bound, bound)
        params.append((w_t, b))
    return params


def mlp_reference(x, params, *, use_bf16_elementwise=False):
    """Pure-JAX reference mirroring the kernel math exactly (bf16 matmul inputs,
    f32 MXU accumulation, bf16 or f32 bias-add/ReLU)."""
    n = len(params)
    h = x.astype(jnp.bfloat16)
    for i, (w, b) in enumerate(params):
        acc = jnp.dot(h, w.astype(jnp.bfloat16), preferred_element_type=jnp.float32)
        if i == n - 1:
            return acc + b.astype(jnp.float32)
        if use_bf16_elementwise:
            h = jnp.maximum(acc.astype(jnp.bfloat16) + b.astype(jnp.bfloat16), 0.0)
        else:
            h = jnp.maximum(acc + b.astype(jnp.float32), 0.0).astype(jnp.bfloat16)
    return h


if __name__ == "__main__":
    key = jax.random.PRNGKey(0)
    key, kx = jax.random.split(key)

    batch, input_size, width, num_classes = 64, 32, 64, 10
    x = jax.random.normal(kx, (batch, input_size), jnp.float32)
    params = init_mlp_params(key, input_size, width=width, num_classes=num_classes)

    use_bf16_ew = _supports_bf16_vpu(_device_kind())
    out = jax.block_until_ready(
        mlp_forward(x, params, use_bf16_elementwise=use_bf16_ew))

    ref = mlp_reference(x, params, use_bf16_elementwise=use_bf16_ew)
    assert out.shape == (batch, num_classes), out.shape
    assert jnp.allclose(out, ref, atol=2e-2, rtol=2e-2), "mismatch vs reference"

    print("KERNEL_OK")
</pallas_src>

<mosaic_0001>
module attributes {stable_mosaic.version = 11 : i64} {
  func.func @_mlp_kernel(%arg0: i32, %arg1: memref<64x32xbf16, #tpu.memory_space<vmem>>, %arg2: memref<32x128xbf16, #tpu.memory_space<vmem>>, %arg3: memref<4x128x128xbf16, #tpu.memory_space<vmem>>, %arg4: memref<128x128xbf16, #tpu.memory_space<vmem>>, %arg5: memref<8x128xf32, #tpu.memory_space<vmem>>, %arg6: memref<1x128xf32, #tpu.memory_space<vmem>>, %arg7: memref<64x128xf32, #tpu.memory_space<vmem>>) attributes {dimension_semantics = [#tpu.dimension_semantics<parallel>], iteration_bounds = array<i64: 1>, scalar_prefetch = 0 : i64, scratch_operands = 0 : i64, tpu.core_type = #tpu.core_type<tc>, window_params = [{transform_indices = @transform_0, window_bounds = array<i64: 64, 32>}, {pipeline_mode = #tpu.pipeline_mode<synchronous>, transform_indices = @transform_1, window_bounds = array<i64: 32, 128>}, {pipeline_mode = #tpu.pipeline_mode<synchronous>, transform_indices = @transform_2, window_bounds = array<i64: 4, 128, 128>}, {pipeline_mode = #tpu.pipeline_mode<synchronous>, transform_indices = @transform_3, window_bounds = array<i64: 128, 128>}, {pipeline_mode = #tpu.pipeline_mode<synchronous>, transform_indices = @transform_4, window_bounds = array<i64: 8, 128>}, {pipeline_mode = #tpu.pipeline_mode<synchronous>, transform_indices = @transform_5, window_bounds = array<i64: 1, 128>}, {transform_indices = @transform_6, window_bounds = array<i64: 64, 128>}]} {
    %c0 = arith.constant 0 : index
    %c0_0 = arith.constant 0 : index
    %0 = vector.load %arg1[%c0, %c0_0] : memref<64x32xbf16, #tpu.memory_space<vmem>>, vector<64x32xbf16>
    %c0_1 = arith.constant 0 : index
    %c0_2 = arith.constant 0 : index
    %1 = vector.load %arg2[%c0_1, %c0_2] : memref<32x128xbf16, #tpu.memory_space<vmem>>, vector<32x128xbf16>
    %cst = arith.constant dense<0.000000e+00> : vector<64x128xf32>
    %2 = tpu.matmul %0, %1, %cst {dimension_numbers = #tpu.dot_dimension_numbers<[1], [0], [0], [1], [0, 0, 1, 1], [], []>} : vector<64x32xbf16>, vector<32x128xbf16>, vector<64x128xf32> -> vector<64x128xf32>
    %c0_3 = arith.constant 0 : index
    %c0_4 = arith.constant 0 : index
    %3 = vector.load %arg5[%c0_3, %c0_4] : memref<8x128xf32, #tpu.memory_space<vmem>>, vector<1x128xf32>
    %4 = vector.broadcast %3 : vector<1x128xf32> to vector<64x128xf32>
    %5 = arith.addf %2, %4 : vector<64x128xf32>
    %cst_5 = arith.constant 0.000000e+00 : f32
    %6 = vector.broadcast %cst_5 : f32 to vector<64x128xf32>
    %7 = arith.maximumf %5, %6 : vector<64x128xf32>
    %8 = arith.truncf %7 : vector<64x128xf32> to vector<64x128xbf16>
    %c0_6 = arith.constant 0 : index
    %c0_7 = arith.constant 0 : index
    %c0_8 = arith.constant 0 : index
    %9 = vector.load %arg3[%c0_6, %c0_7, %c0_8] : memref<4x128x128xbf16, #tpu.memory_space<vmem>>, vector<1x128x128xbf16>
    %10 = vector.shape_cast %9 : vector<1x128x128xbf16> to vector<128x128xbf16>
    %cst_9 = arith.constant dense<0.000000e+00> : vector<64x128xf32>
    %11 = tpu.matmul %8, %10, %cst_9 {dimension_numbers = #tpu.dot_dimension_numbers<[1], [0], [0], [1], [0, 0, 1, 1], [], []>} : vector<64x128xbf16>, vector<128x128xbf16>, vector<64x128xf32> -> vector<64x128xf32>
    %c1 = arith.constant 1 : index
    %c0_10 = arith.constant 0 : index
    %12 = vector.load %arg5[%c1, %c0_10] : memref<8x128xf32, #tpu.memory_space<vmem>>, vector<1x128xf32>
    %13 = vector.broadcast %12 : vector<1x128xf32> to vector<64x128xf32>
    %14 = arith.addf %11, %13 : vector<64x128xf32>
    %cst_11 = arith.constant 0.000000e+00 : f32
    %15 = vector.broadcast %cst_11 : f32 to vector<64x128xf32>
    %16 = arith.maximumf %14, %15 : vector<64x128xf32>
    %17 = arith.truncf %16 : vector<64x128xf32> to vector<64x128xbf16>
    %c1_12 = arith.constant 1 : index
    %c0_13 = arith.constant 0 : index
    %c0_14 = arith.constant 0 : index
    %18 = vector.load %arg3[%c1_12, %c0_13, %c0_14] : memref<4x128x128xbf16, #tpu.memory_space<vmem>>, vector<1x128x128xbf16>
    %19 = vector.shape_cast %18 : vector<1x128x128xbf16> to vector<128x128xbf16>
    %cst_15 = arith.constant dense<0.000000e+00> : vector<64x128xf32>
    %20 = tpu.matmul %17, %19, %cst_15 {dimension_numbers = #tpu.dot_dimension_numbers<[1], [0], [0], [1], [0, 0, 1, 1], [], []>} : vector<64x128xbf16>, vector<128x128xbf16>, vector<64x128xf32> -> vector<64x128xf32>
    %c2 = arith.constant 2 : index
    %c0_16 = arith.constant 0 : index
    %21 = vector.load %arg5[%c2, %c0_16] : memref<8x128xf32, #tpu.memory_space<vmem>>, vector<1x128xf32>
    %22 = vector.broadcast %21 : vector<1x128xf32> to vector<64x128xf32>
    %23 = arith.addf %20, %22 : vector<64x128xf32>
    %cst_17 = arith.constant 0.000000e+00 : f32
    %24 = vector.broadcast %cst_17 : f32 to vector<64x128xf32>
    %25 = arith.maximumf %23, %24 : vector<64x128xf32>
    %26 = arith.truncf %25 : vector<64x128xf32> to vector<64x128xbf16>
    %c2_18 = arith.constant 2 : index
    %c0_19 = arith.constant 0 : index
    %c0_20 = arith.constant 0 : index
    %27 = vector.load %arg3[%c2_18, %c0_19, %c0_20] : memref<4x128x128xbf16, #tpu.memory_space<vmem>>, vector<1x128x128xbf16>
    %28 = vector.shape_cast %27 : vector<1x128x128xbf16> to vector<128x128xbf16>
    %cst_21 = arith.constant dense<0.000000e+00> : vector<64x128xf32>
    %29 = tpu.matmul %26, %28, %cst_21 {dimension_numbers = #tpu.dot_dimension_numbers<[1], [0], [0], [1], [0, 0, 1, 1], [], []>} : vector<64x128xbf16>, vector<128x128xbf16>, vector<64x128xf32> -> vector<64x128xf32>
    %c3 = arith.constant 3 : index
    %c0_22 = arith.constant 0 : index
    %30 = vector.load %arg5[%c3, %c0_22] : memref<8x128xf32, #tpu.memory_space<vmem>>, vector<1x128xf32>
    %31 = vector.broadcast %30 : vector<1x128xf32> to vector<64x128xf32>
    %32 = arith.addf %29, %31 : vector<64x128xf32>
    %cst_23 = arith.constant 0.000000e+00 : f32
    %33 = vector.broadcast %cst_23 : f32 to vector<64x128xf32>
    %34 = arith.maximumf %32, %33 : vector<64x128xf32>
    %35 = arith.truncf %34 : vector<64x128xf32> to vector<64x128xbf16>
    %c3_24 = arith.constant 3 : index
    %c0_25 = arith.constant 0 : index
    %c0_26 = arith.constant 0 : index
    %36 = vector.load %arg3[%c3_24, %c0_25, %c0_26] : memref<4x128x128xbf16, #tpu.memory_space<vmem>>, vector<1x128x128xbf16>
    %37 = vector.shape_cast %36 : vector<1x128x128xbf16> to vector<128x128xbf16>
    %cst_27 = arith.constant dense<0.000000e+00> : vector<64x128xf32>
    %38 = tpu.matmul %35, %37, %cst_27 {dimension_numbers = #tpu.dot_dimension_numbers<[1], [0], [0], [1], [0, 0, 1, 1], [], []>} : vector<64x128xbf16>, vector<128x128xbf16>, vector<64x128xf32> -> vector<64x128xf32>
    %c4 = arith.constant 4 : index
    %c0_28 = arith.constant 0 : index
    %39 = vector.load %arg5[%c4, %c0_28] : memref<8x128xf32, #tpu.memory_space<vmem>>, vector<1x128xf32>
    %40 = vector.broadcast %39 : vector<1x128xf32> to vector<64x128xf32>
    %41 = arith.addf %38, %40 : vector<64x128xf32>
    %cst_29 = arith.constant 0.000000e+00 : f32
    %42 = vector.broadcast %cst_29 : f32 to vector<64x128xf32>
    %43 = arith.maximumf %41, %42 : vector<64x128xf32>
    %44 = arith.truncf %43 : vector<64x128xf32> to vector<64x128xbf16>
    %c0_30 = arith.constant 0 : index
    %c0_31 = arith.constant 0 : index
    %45 = vector.load %arg4[%c0_30, %c0_31] : memref<128x128xbf16, #tpu.memory_space<vmem>>, vector<128x128xbf16>
    %cst_32 = arith.constant dense<0.000000e+00> : vector<64x128xf32>
    %46 = tpu.matmul %44, %45, %cst_32 {dimension_numbers = #tpu.dot_dimension_numbers<[1], [0], [0], [1], [0, 0, 1, 1], [], []>} : vector<64x128xbf16>, vector<128x128xbf16>, vector<64x128xf32> -> vector<64x128xf32>
    %c0_33 = arith.constant 0 : index
    %c0_34 = arith.constant 0 : index
    %47 = vector.load %arg6[%c0_33, %c0_34] : memref<1x128xf32, #tpu.memory_space<vmem>>, vector<1x128xf32>
    %48 = vector.broadcast %47 : vector<1x128xf32> to vector<64x128xf32>
    %49 = arith.addf %46, %48 : vector<64x128xf32>
    %c0_35 = arith.constant 0 : index
    %c0_36 = arith.constant 0 : index
    %50 = vector.load %arg7[%c0_35, %c0_36] : memref<64x128xf32, #tpu.memory_space<vmem>>, vector<64x128xf32>
    tpu.vector_store %arg7[%c0_35, %c0_36], %49 {strides = array<i32>} : memref<64x128xf32, #tpu.memory_space<vmem>>, vector<64x128xf32>,
    return
  }
  func.func @transform_0(%arg0: i32) -> (i32, i32) {
    %c0_i32 = arith.constant 0 : i32
    %c0_i32_0 = arith.constant 0 : i32
    return %arg0, %c0_i32 : i32, i32
  }
  func.func @transform_1(%arg0: i32) -> (i32, i32) {
    %c0_i32 = arith.constant 0 : i32
    %c0_i32_0 = arith.constant 0 : i32
    %c0_i32_1 = arith.constant 0 : i32
    return %c0_i32, %c0_i32_0 : i32, i32
  }
  func.func @transform_2(%arg0: i32) -> (i32, i32, i32) {
    %c0_i32 = arith.constant 0 : i32
    %c0_i32_0 = arith.constant 0 : i32
    %c0_i32_1 = arith.constant 0 : i32
    %c0_i32_2 = arith.constant 0 : i32
    return %c0_i32, %c0_i32_0, %c0_i32_1 : i32, i32, i32
  }
  func.func @transform_3(%arg0: i32) -> (i32, i32) {
    %c0_i32 = arith.constant 0 : i32
    %c0_i32_0 = arith.constant 0 : i32
    %c0_i32_1 = arith.constant 0 : i32
    return %c0_i32, %c0_i32_0 : i32, i32
  }
  func.func @transform_4(%arg0: i32) -> (i32, i32) {
    %c0_i32 = arith.constant 0 : i32
    %c0_i32_0 = arith.constant 0 : i32
    %c0_i32_1 = arith.constant 0 : i32
    return %c0_i32, %c0_i32_0 : i32, i32
  }
  func.func @transform_5(%arg0: i32) -> (i32, i32) {
    %c0_i32 = arith.constant 0 : i32
    %c0_i32_0 = arith.constant 0 : i32
    %c0_i32_1 = arith.constant 0 : i32
    return %c0_i32, %c0_i32_0 : i32, i32
  }
  func.func @transform_6(%arg0: i32) -> (i32, i32) {
    %c0_i32 = arith.constant 0 : i32
    %c0_i32_0 = arith.constant 0 : i32
    return %arg0, %c0_i32 : i32, i32
  }
}

</mosaic_0001>

<llo_original>
// kernel: tpu_custom_call.1
$region0: #{tpu_custom_call.1}
  #allocation0 [shape = 'u32[]', space=smem, size = 0x4, offset = 0x4, fixed_abs, tag = 'smem constant byte address 0x4 - core index']
  #allocation1 [shape = 'u32[144,128]{1,0:T(1,128)}', space=vmem, size = 0x12000, scoped, tag = 'internal scratch']
  %s0 = inlined_call_operand.vmem [shape: bf16[64,32], index: 0, kind: input, shape index: {}]
  %s1 = inlined_call_operand.vmem [shape: bf16[32,128], index: 1, kind: input, shape index: {}]
  %s2 = inlined_call_operand.hbm [shape: bf16[4,128,128], index: 2, kind: input, shape index: {}]
  %s3 = inlined_call_operand.hbm [shape: bf16[128,128], index: 3, kind: input, shape index: {}]
  %s4 = inlined_call_operand.vmem [shape: f32[8,128], index: 4, kind: input, shape index: {}]
  %s5 = inlined_call_operand.vmem [shape: f32[1,128], index: 5, kind: input, shape index: {}]
  %s6 = inlined_call_operand.hbm [shape: f32[64,128], index: 6, kind: output, shape index: {}]
  %s7 = sld [smem:[#allocation0]]
  $region42: #{tpu_custom_call.1} parent=0
    _
  %s9 = ssub.s32 1, %s7
  %s10 = scalar_select 0, %s9, %s7
  $region1: #{tpu_custom_call.1} parent=0
    #allocation2 [shape = 'u8[131072]{0}', space=vmem, size = 0x20000, scoped, tag = 'input window, operand 2, single buffered']
    #allocation3 [shape = 's32[1]{0}', space=sflag, size = 0x4, scoped, tag = 'scoped memory for tpu_custom_call.1']
    #allocation4 [shape = 's32[1]{0}', space=sflag, size = 0x4, scoped, tag = 'scoped memory for tpu_custom_call.1']
    #allocation5 [shape = 'u8[32768]{0}', space=vmem, size = 0x8000, scoped, tag = 'input window, operand 3, single buffered']
    #allocation6 [shape = 's32[1]{0}', space=sflag, size = 0x4, scoped, tag = 'scoped memory for tpu_custom_call.1']
    #allocation7 [shape = 'u8[32768]{0}', space=vmem, size = 0x8000, scoped, tag = 'output window, operand 0, single buffered']
    %11 = vsyncpa [#allocation3], 0
    %12 = vsyncpa [#allocation6], 0
    %13 = vsyncpa [#allocation4], 0
    // Predicated region
    $region2: #{tpu_custom_call.1} parent=1 // pred_check
      _
    $region3: #{tpu_custom_call.1} parent=1 // pred_check_branch
      %15 = sbr.rel (0) target = $region5
    $region4: #{tpu_custom_call.1} parent=1 // pred_region
      _
    $region5: #{tpu_custom_call.1} parent=1 // pred_fallthru
      _
    // Predicated region
    $region6: #{tpu_custom_call.1} parent=1 // pred_check
      _
    $region7: #{tpu_custom_call.1} parent=1 // pred_check_branch
      %17 = sbr.rel (0) target = $region9
    $region8: #{tpu_custom_call.1} parent=1 // pred_region
      _
    $region9: #{tpu_custom_call.1} parent=1 // pred_fallthru
      _
    // Predicated region
    $region10: #{tpu_custom_call.1} parent=1 // pred_check
      _
    $region11: #{tpu_custom_call.1} parent=1 // pred_check_branch
      %19 = sbr.rel (0) target = $region13
    $region12: #{tpu_custom_call.1} parent=1 // pred_region
      %s21 = ssub.s32 4096, 4096
      %22 = vsyncadd [#allocation3], %s21
      %s23 = sshll.u32 [#allocation2], 4
      %s24 = int_to_ptr.vmem [resolvable:$true] %s23
      %29 = dma.hbm_to_vmem [thread:$0]  %s2, 4096, %s24, [#allocation3], 64, 64, 4
    $region13: #{tpu_custom_call.1} parent=1 // pred_fallthru
      _
    // Predicated region
    $region14: #{tpu_custom_call.1} parent=1 // pred_check
      _
    $region15: #{tpu_custom_call.1} parent=1 // pred_check_branch
      %31 = sbr.rel (0) target = $region17
    $region16: #{tpu_custom_call.1} parent=1 // pred_region
      %s33 = ssub.s32 1024, 1024
      %34 = vsyncadd [#allocation6], %s33
      %s35 = sshll.u32 [#allocation5], 4
      %s36 = int_to_ptr.vmem [resolvable:$true] %s35
      %41 = dma.hbm_to_vmem [thread:$0]  %s3, 1024, %s36, [#allocation6], 64, 64, 4
    $region17: #{tpu_custom_call.1} parent=1 // pred_fallthru
      _
    // Predicated region
    $region18: #{tpu_custom_call.1} parent=1 // pred_check
      _
    $region19: #{tpu_custom_call.1} parent=1 // pred_check_branch
      %43 = sbr.rel (0) target = $region21
    $region20: #{tpu_custom_call.1} parent=1 // pred_region
      _
    $region21: #{tpu_custom_call.1} parent=1 // pred_fallthru
      _
    // Predicated region
    $region22: #{tpu_custom_call.1} parent=1 // pred_check
      _
    $region23: #{tpu_custom_call.1} parent=1 // pred_check_branch
      %45 = sbr.rel (0) target = $region25
    $region24: #{tpu_custom_call.1} parent=1 // pred_region
      _
    $region25: #{tpu_custom_call.1} parent=1 // pred_fallthru
      _
    // Predicated region
    $region26: #{tpu_custom_call.1} parent=1 // pred_check
      _
    $region27: #{tpu_custom_call.1} parent=1 // pred_check_branch
      %47 = sbr.rel (0) target = $region29
    $region28: #{tpu_custom_call.1} parent=1 // pred_region
      %48 = dma.done [#allocation3], 4096
    $region29: #{tpu_custom_call.1} parent=1 // pred_fallthru
      _
    // Predicated region
    $region30: #{tpu_custom_call.1} parent=1 // pred_check
      _
    $region31: #{tpu_custom_call.1} parent=1 // pred_check_branch
      %50 = sbr.rel (0) target = $region33
    $region32: #{tpu_custom_call.1} parent=1 // pred_region
      %51 = dma.done [#allocation6], 1024
    $region33: #{tpu_custom_call.1} parent=1 // pred_fallthru
      _
    %v53 = vld [vmem:[%s0] sm:$0xf]
    %v54 = vld [vmem:[%s0 + $0x4] sm:$0xf]
    %v55 = vld [vmem:[%s0 + $0x8] sm:$0xf]
    %v56 = vld [vmem:[%s0 + $0xc] sm:$0xf]
    %v57 = vld [vmem:[%s0 + $0x10] sm:$0xf]
    %v58 = vld [vmem:[%s0 + $0x14] sm:$0xf]
    %v59 = vld [vmem:[%s0 + $0x18] sm:$0xf]
    %v60 = vld [vmem:[%s0 + $0x1c] sm:$0xf]
    %v61 = vld [vmem:[%s1] sm:$0xf]
    %v62 = vld [vmem:[%s1 + $0x4] sm:$0xf]
    %v63 = vld [vmem:[%s1 + $0x8] sm:$0xf]
    %v64 = vld [vmem:[%s1 + $0xc] sm:$0xf]
    %v65 = vld [vmem:[%s4] sm:$0x1]
    %v66 = vlaneseq
    %v67 = vshrl.u32 %v66, 7
    %v68 = vsub.s32 0, %v67
    %v69 = vrot.slane %v65, %v68
    %v78 = vunpack.c.l.b16 %v53
    %v79 = vunpack.c.l.b16 %v54
    %v80 = vunpack.c.l.b16 %v55
    %v81 = vunpack.c.l.b16 %v56
    %v82 = vunpack.c.l.b16 %v57
    %v83 = vunpack.c.l.b16 %v58
    %v84 = vunpack.c.l.b16 %v59
    %v85 = vunpack.c.l.b16 %v60
    %v86 = vpack.c.b16 %v79, %v78
    %v87 = vpack.c.b16 %v81, %v80
    %v88 = vpack.c.b16 %v83, %v82
    %v89 = vpack.c.b16 %v85, %v84
    %v94 = vunpack.c.l.b16 %v61
    %v95 = vunpack.c.l.b16 %v62
    %v96 = vunpack.c.l.b16 %v63
    %v97 = vunpack.c.l.b16 %v64
    %v98 = vpack.c.b16 %v95, %v94
    %v99 = vpack.c.b16 %v97, %v96
    %vm102 = vcmask 261120
    %v104 = vsel %vm102, %v86, 0
    %v107 = vsel %vm102, %v87, 0
    %v110 = vsel %vm102, %v88, 0
    %v113 = vsel %vm102, %v89, 0
    %115 = vmatprep.subr.bf16.mxu0 0
    %116 = vmatpush1.bf16.msra.mxu0 0
    %117 = vmatprep.subr.bf16.mxu0 0
    %118 = vmatpush1.bf16.msra.mxu0 0
    %119 = vmatprep.subr.bf16.mxu0 0
    %120 = vmatpush1.bf16.msra.mxu0 0
    %121 = vmatprep.subr.bf16.mxu0 0
    %122 = vmatpush1.bf16.msra.mxu0 0
    %123 = vmatprep.subr.bf16.mxu0 0
    %124 = vmatpush1.bf16.msra.mxu0 0
    %125 = vmatprep.subr.bf16.mxu0 0
    %126 = vmatpush1.bf16.msra.mxu0 0
    %127 = vmatprep.subr.bf16.mxu0 0
    %128 = vmatpush1.bf16.msra.mxu0 %v99
    %129 = vmatprep.subr.bf16.mxu0 0
    %130 = vmatpush1.bf16.msra.mxu0 %v98
    %131 = vmatprep.subr.bf16.mxu0 0
    %132 = vmatpush2.bf16.msra.mxu0 0
    %133 = vmatprep.subr.bf16.mxu0 0
    %134 = vmatpush2.bf16.msra.mxu0 0
    %135 = vmatprep.subr.bf16.mxu0 0
    %136 = vmatpush2.bf16.msra.mxu0 0
    %137 = vmatprep.subr.bf16.mxu0 0
    %138 = vmatpush2.bf16.msra.mxu0 0
    %139 = vmatprep.subr.bf16.mxu0 0
    %140 = vmatpush2.bf16.msra.mxu0 0
    %141 = vmatprep.subr.bf16.mxu0 0
    %142 = vmatpush2.bf16.msra.mxu0 0
    %143 = vmatprep.subr.bf16.mxu0 0
    %144 = vmatpush2.bf16.msra.mxu0 0
    %145 = vmatprep.subr.bf16.mxu0 0
    %146 = vmatpush2.bf16.msra.mxu0 0
    %147 = vmatprep.mubr.bf16.mxu0 0
    %148 = vmatmul.mubr.bf16.gmra.mxu0 %v104
    %v149 = vpop.f32.mrf.mxu0
    %v150 = vadd.f32 %v69, %v149
    %v151 = vpop.f32.mrf.mxu0
    %v152 = vpop.f32.mrf.mxu0
    %v153 = vadd.f32 %v69, %v152
    %v154 = vpop.f32.mrf.mxu0
    %155 = vmatprep.mubr.bf16.mxu0 0
    %156 = vmatmul.mubr.bf16.gmra.mxu0 %v107
    %v157 = vpop.f32.mrf.mxu0
    %v158 = vadd.f32 %v69, %v157
    %v159 = vpop.f32.mrf.mxu0
    %v160 = vpop.f32.mrf.mxu0
    %v161 = vadd.f32 %v69, %v160
    %v162 = vpop.f32.mrf.mxu0
    %163 = vmatprep.mubr.bf16.mxu0 0
    %164 = vmatmul.mubr.bf16.gmra.mxu0 %v110
    %v165 = vpop.f32.mrf.mxu0
    %v166 = vadd.f32 %v69, %v165
    %v167 = vpop.f32.mrf.mxu0
    %v168 = vpop.f32.mrf.mxu0
    %v169 = vadd.f32 %v69, %v168
    %v170 = vpop.f32.mrf.mxu0
    %171 = vmatprep.mubr.bf16.mxu0 0
    %172 = vmatmul.mubr.bf16.gmra.mxu0 %v113
    %v173 = vpop.f32.mrf.mxu0
    %v174 = vadd.f32 %v69, %v173
    %v175 = vpop.f32.mrf.mxu0
    %v176 = vpop.f32.mrf.mxu0
    %v177 = vadd.f32 %v69, %v176
    %v178 = vpop.f32.mrf.mxu0
    %179 = vdwg.mxu0
    %v180 = vmax.f32 %v150, 0.0
    %v181 = vmax.f32 %v153, 0.0
    %v182 = vmax.f32 %v158, 0.0
    %v183 = vmax.f32 %v161, 0.0
    %v184 = vmax.f32 %v166, 0.0
    %v185 = vmax.f32 %v169, 0.0
    %v186 = vmax.f32 %v174, 0.0
    %v187 = vmax.f32 %v177, 0.0
    %v188 = vpack.c.bf16 %v181, %v180
    %v189 = vpack.c.bf16 %v183, %v182
    %v190 = vpack.c.bf16 %v185, %v184
    %v191 = vpack.c.bf16 %v187, %v186
    %v192 = vld [vmem:[#allocation2] sm:$0xf]
    %v193 = vld [vmem:[#allocation2 + $0x4] sm:$0xf]
    %v194 = vld [vmem:[#allocation2 + $0x8] sm:$0xf]
    %v195 = vld [vmem:[#allocation2 + $0xc] sm:$0xf]
    %v196 = vld [vmem:[#allocation2 + $0x10] sm:$0xf]
    %v197 = vld [vmem:[#allocation2 + $0x14] sm:$0xf]
    %v198 = vld [vmem:[#allocation2 + $0x18] sm:$0xf]
    %v199 = vld [vmem:[#allocation2 + $0x1c] sm:$0xf]
    %v200 = vld [vmem:[#allocation2 + $0x20] sm:$0xf]
    %v201 = vld [vmem:[#allocation2 + $0x24] sm:$0xf]
    %v202 = vld [vmem:[#allocation2 + $0x28] sm:$0xf]
    %v203 = vld [vmem:[#allocation2 + $0x2c] sm:$0xf]
    %v204 = vld [vmem:[#allocation2 + $0x30] sm:$0xf]
    %v205 = vld [vmem:[#allocation2 + $0x34] sm:$0xf]
    %v206 = vld [vmem:[#allocation2 + $0x38] sm:$0xf]
    %v207 = vld [vmem:[#allocation2 + $0x3c] sm:$0xf]
    %v208 = vld [vmem:[%s4 + $0x1] sm:$0x1]
    %v209 = vlaneseq
    %v210 = vshrl.u32 %v209, 7
    %v211 = vsub.s32 0, %v210
    %v212 = vrot.slane %v208, %v211
    %v229 = vunpack.c.l.b16 %v192
    %v230 = vunpack.c.l.b16 %v193
    %v231 = vunpack.c.l.b16 %v194
    %v232 = vunpack.c.l.b16 %v195
    %v233 = vunpack.c.l.b16 %v196
    %v234 = vunpack.c.l.b16 %v197
    %v235 = vunpack.c.l.b16 %v198
    %v236 = vunpack.c.l.b16 %v199
    %v237 = vunpack.c.l.b16 %v200
    %v238 = vunpack.c.l.b16 %v201
    %v239 = vunpack.c.l.b16 %v202
    %v240 = vunpack.c.l.b16 %v203
    %v241 = vunpack.c.l.b16 %v204
    %v242 = vunpack.c.l.b16 %v205
    %v243 = vunpack.c.l.b16 %v206
    %v244 = vunpack.c.l.b16 %v207
    %v245 = vpack.c.b16 %v230, %v229
    %v246 = vpack.c.b16 %v232, %v231
    %v247 = vpack.c.b16 %v234, %v233
    %v248 = vpack.c.b16 %v236, %v235
    %v249 = vpack.c.b16 %v238, %v237
    %v250 = vpack.c.b16 %v240, %v239
    %v251 = vpack.c.b16 %v242, %v241
    %v252 = vpack.c.b16 %v244, %v243
    %261 = vmatprep.subr.bf16.mxu0 0
    %262 = vmatpush1.bf16.msra.mxu0 %v252
    %263 = vmatprep.subr.bf16.mxu0 0
    %264 = vmatpush1.bf16.msra.mxu0 %v251
    %265 = vmatprep.subr.bf16.mxu0 0
    %266 = vmatpush1.bf16.msra.mxu0 %v250
    %267 = vmatprep.subr.bf16.mxu0 0
    %268 = vmatpush1.bf16.msra.mxu0 %v249
    %269 = vmatprep.subr.bf16.mxu0 0
    %270 = vmatpush1.bf16.msra.mxu0 %v248
    %271 = vmatprep.subr.bf16.mxu0 0
    %272 = vmatpush1.bf16.msra.mxu0 %v247
    %273 = vmatprep.subr.bf16.mxu0 0
    %274 = vmatpush1.bf16.msra.mxu0 %v246
    %275 = vmatprep.subr.bf16.mxu0 0
    %276 = vmatpush1.bf16.msra.mxu0 %v245
    %277 = vmatprep.subr.bf16.mxu0 0
    %278 = vmatpush2.bf16.msra.mxu0 0
    %279 = vmatprep.subr.bf16.mxu0 0
    %280 = vmatpush2.bf16.msra.mxu0 0
    %281 = vmatprep.subr.bf16.mxu0 0
    %282 = vmatpush2.bf16.msra.mxu0 0
    %283 = vmatprep.subr.bf16.mxu0 0
    %284 = vmatpush2.bf16.msra.mxu0 0
    %285 = vmatprep.subr.bf16.mxu0 0
    %286 = vmatpush2.bf16.msra.mxu0 0
    %287 = vmatprep.subr.bf16.mxu0 0
    %288 = vmatpush2.bf16.msra.mxu0 0
    %289 = vmatprep.subr.bf16.mxu0 0
    %290 = vmatpush2.bf16.msra.mxu0 0
    %291 = vmatprep.subr.bf16.mxu0 0
    %292 = vmatpush2.bf16.msra.mxu0 0
    %293 = vmatprep.mubr.bf16.mxu0 0
    %294 = vmatmul.mubr.bf16.gmra.mxu0 %v188
    %v295 = vpop.f32.mrf.mxu0
    %v296 = vadd.f32 %v212, %v295
    %v297 = vpop.f32.mrf.mxu0
    %v298 = vpop.f32.mrf.mxu0
    %v299 = vadd.f32 %v212, %v298
    %v300 = vpop.f32.mrf.mxu0
    %301 = vmatprep.mubr.bf16.mxu0 0
    %302 = vmatmul.mubr.bf16.gmra.mxu0 %v189
    %v303 = vpop.f32.mrf.mxu0
    %v304 = vadd.f32 %v212, %v303
    %v305 = vpop.f32.mrf.mxu0
    %v306 = vpop.f32.mrf.mxu0
    %v307 = vadd.f32 %v212, %v306
    %v308 = vpop.f32.mrf.mxu0
    %309 = vmatprep.mubr.bf16.mxu0 0
    %310 = vmatmul.mubr.bf16.gmra.mxu0 %v190
    %v311 = vpop.f32.mrf.mxu0
    %v312 = vadd.f32 %v212, %v311
    %v313 = vpop.f32.mrf.mxu0
    %v314 = vpop.f32.mrf.mxu0
    %v315 = vadd.f32 %v212, %v314
    %v316 = vpop.f32.mrf.mxu0
    %317 = vmatprep.mubr.bf16.mxu0 0
    %318 = vmatmul.mubr.bf16.gmra.mxu0 %v191
    %v319 = vpop.f32.mrf.mxu0
    %v320 = vadd.f32 %v212, %v319
    %v321 = vpop.f32.mrf.mxu0
    %v322 = vpop.f32.mrf.mxu0
    %v323 = vadd.f32 %v212, %v322
    %v324 = vpop.f32.mrf.mxu0
    %325 = vdwg.mxu0
    %v326 = vmax.f32 %v296, 0.0
    %v327 = vmax.f32 %v299, 0.0
    %v328 = vmax.f32 %v304, 0.0
    %v329 = vmax.f32 %v307, 0.0
    %v330 = vmax.f32 %v312, 0.0
    %v331 = vmax.f32 %v315, 0.0
    %v332 = vmax.f32 %v320, 0.0
    %v333 = vmax.f32 %v323, 0.0
    %v334 = vpack.c.bf16 %v327, %v326
    %v335 = vpack.c.bf16 %v329, %v328
    %v336 = vpack.c.bf16 %v331, %v330
    %v337 = vpack.c.bf16 %v333, %v332
    %s338 = scalar_lea.vmem [#allocation2], 64
    %v339 = vld [vmem:[%s338] sm:$0xf]
    %v340 = vld [vmem:[%s338 + $0x4] sm:$0xf]
    %v341 = vld [vmem:[%s338 + $0x8] sm:$0xf]
    %v342 = vld [vmem:[%s338 + $0xc] sm:$0xf]
    %v343 = vld [vmem:[%s338 + $0x10] sm:$0xf]
    %v344 = vld [vmem:[%s338 + $0x14] sm:$0xf]
    %v345 = vld [vmem:[%s338 + $0x18] sm:$0xf]
    %v346 = vld [vmem:[%s338 + $0x1c] sm:$0xf]
    %v347 = vld [vmem:[%s338 + $0x20] sm:$0xf]
    %v348 = vld [vmem:[%s338 + $0x24] sm:$0xf]
    %v349 = vld [vmem:[%s338 + $0x28] sm:$0xf]
    %v350 = vld [vmem:[%s338 + $0x2c] sm:$0xf]
    %v351 = vld [vmem:[%s338 + $0x30] sm:$0xf]
    %v352 = vld [vmem:[%s338 + $0x34] sm:$0xf]
    %v353 = vld [vmem:[%s338 + $0x38] sm:$0xf]
    %v354 = vld [vmem:[%s338 + $0x3c] sm:$0xf]
    %v355 = vld [vmem:[%s4 + $0x2] sm:$0x1]
    %v356 = vlaneseq
    %v357 = vshrl.u32 %v356, 7
    %v358 = vsub.s32 0, %v357
    %v359 = vrot.slane %v355, %v358
    %v376 = vunpack.c.l.b16 %v339
    %v377 = vunpack.c.l.b16 %v340
    %v378 = vunpack.c.l.b16 %v341
    %v379 = vunpack.c.l.b16 %v342
    %v380 = vunpack.c.l.b16 %v343
    %v381 = vunpack.c.l.b16 %v344
    %v382 = vunpack.c.l.b16 %v345
    %v383 = vunpack.c.l.b16 %v346
    %v384 = vunpack.c.l.b16 %v347
    %v385 = vunpack.c.l.b16 %v348
    %v386 = vunpack.c.l.b16 %v349
    %v387 = vunpack.c.l.b16 %v350
    %v388 = vunpack.c.l.b16 %v351
    %v389 = vunpack.c.l.b16 %v352
    %v390 = vunpack.c.l.b16 %v353
    %v391 = vunpack.c.l.b16 %v354
    %v392 = vpack.c.b16 %v377, %v376
    %v393 = vpack.c.b16 %v379, %v378
    %v394 = vpack.c.b16 %v381, %v380
    %v395 = vpack.c.b16 %v383, %v382
    %v396 = vpack.c.b16 %v385, %v384
    %v397 = vpack.c.b16 %v387, %v386
    %v398 = vpack.c.b16 %v389, %v388
    %v399 = vpack.c.b16 %v391, %v390
    %408 = vmatprep.subr.bf16.mxu0 0
    %409 = vmatpush1.bf16.msra.mxu0 %v399
    %410 = vmatprep.subr.bf16.mxu0 0
    %411 = vmatpush1.bf16.msra.mxu0 %v398
    %412 = vmatprep.subr.bf16.mxu0 0
    %413 = vmatpush1.bf16.msra.mxu0 %v397
    %414 = vmatprep.subr.bf16.mxu0 0
    %415 = vmatpush1.bf16.msra.mxu0 %v396
    %416 = vmatprep.subr.bf16.mxu0 0
    %417 = vmatpush1.bf16.msra.mxu0 %v395
    %418 = vmatprep.subr.bf16.mxu0 0
    %419 = vmatpush1.bf16.msra.mxu0 %v394
    %420 = vmatprep.subr.bf16.mxu0 0
    %421 = vmatpush1.bf16.msra.mxu0 %v393
    %422 = vmatprep.subr.bf16.mxu0 0
    %423 = vmatpush1.bf16.msra.mxu0 %v392
    %424 = vmatprep.subr.bf16.mxu0 0
    %425 = vmatpush2.bf16.msra.mxu0 0
    %426 = vmatprep.subr.bf16.mxu0 0
    %427 = vmatpush2.bf16.msra.mxu0 0
    %428 = vmatprep.subr.bf16.mxu0 0
    %429 = vmatpush2.bf16.msra.mxu0 0
    %430 = vmatprep.subr.bf16.mxu0 0
    %431 = vmatpush2.bf16.msra.mxu0 0
    %432 = vmatprep.subr.bf16.mxu0 0
    %433 = vmatpush2.bf16.msra.mxu0 0
    %434 = vmatprep.subr.bf16.mxu0 0
    %435 = vmatpush2.bf16.msra.mxu0 0
    %436 = vmatprep.subr.bf16.mxu0 0
    %437 = vmatpush2.bf16.msra.mxu0 0
    %438 = vmatprep.subr.bf16.mxu0 0
    %439 = vmatpush2.bf16.msra.mxu0 0
    %440 = vmatprep.mubr.bf16.mxu0 0
    %441 = vmatmul.mubr.bf16.gmra.mxu0 %v334
    %v442 = vpop.f32.mrf.mxu0
    %v443 = vadd.f32 %v359, %v442
    %v444 = vpop.f32.mrf.mxu0
    %v445 = vpop.f32.mrf.mxu0
    %v446 = vadd.f32 %v359, %v445
    %v447 = vpop.f32.mrf.mxu0
    %448 = vmatprep.mubr.bf16.mxu0 0
    %449 = vmatmul.mubr.bf16.gmra.mxu0 %v335
    %v450 = vpop.f32.mrf.mxu0
    %v451 = vadd.f32 %v359, %v450
    %v452 = vpop.f32.mrf.mxu0
    %v453 = vpop.f32.mrf.mxu0
    %v454 = vadd.f32 %v359, %v453
    %v455 = vpop.f32.mrf.mxu0
    %456 = vmatprep.mubr.bf16.mxu0 0
    %457 = vmatmul.mubr.bf16.gmra.mxu0 %v336
    %v458 = vpop.f32.mrf.mxu0
    %v459 = vadd.f32 %v359, %v458
    %v460 = vpop.f32.mrf.mxu0
    %v461 = vpop.f32.mrf.mxu0
    %v462 = vadd.f32 %v359, %v461
    %v463 = vpop.f32.mrf.mxu0
    %464 = vmatprep.mubr.bf16.mxu0 0
    %465 = vmatmul.mubr.bf16.gmra.mxu0 %v337
    %v466 = vpop.f32.mrf.mxu0
    %v467 = vadd.f32 %v359, %v466
    %v468 = vpop.f32.mrf.mxu0
    %v469 = vpop.f32.mrf.mxu0
    %v470 = vadd.f32 %v359, %v469
    %v471 = vpop.f32.mrf.mxu0
    %472 = vdwg.mxu0
    %v473 = vmax.f32 %v443, 0.0
    %v474 = vmax.f32 %v446, 0.0
    %v475 = vmax.f32 %v451, 0.0
    %v476 = vmax.f32 %v454, 0.0
    %v477 = vmax.f32 %v459, 0.0
    %v478 = vmax.f32 %v462, 0.0
    %v479 = vmax.f32 %v467, 0.0
    %v480 = vmax.f32 %v470, 0.0
    %v481 = vpack.c.bf16 %v474, %v473
    %v482 = vpack.c.bf16 %v476, %v475
    %v483 = vpack.c.bf16 %v478, %v477
    %v484 = vpack.c.bf16 %v480, %v479
    %s485 = scalar_lea.vmem [#allocation2], 128
    %v486 = vld [vmem:[%s485] sm:$0xf]
    %v487 = vld [vmem:[%s485 + $0x4] sm:$0xf]
    %v488 = vld [vmem:[%s485 + $0x8] sm:$0xf]
    %v489 = vld [vmem:[%s485 + $0xc] sm:$0xf]
    %v490 = vld [vmem:[%s485 + $0x10] sm:$0xf]
    %v491 = vld [vmem:[%s485 + $0x14] sm:$0xf]
    %v492 = vld [vmem:[%s485 + $0x18] sm:$0xf]
    %v493 = vld [vmem:[%s485 + $0x1c] sm:$0xf]
    %v494 = vld [vmem:[%s485 + $0x20] sm:$0xf]
    %v495 = vld [vmem:[%s485 + $0x24] sm:$0xf]
    %v496 = vld [vmem:[%s485 + $0x28] sm:$0xf]
    %v497 = vld [vmem:[%s485 + $0x2c] sm:$0xf]
    %v498 = vld [vmem:[%s485 + $0x30] sm:$0xf]
    %v499 = vld [vmem:[%s485 + $0x34] sm:$0xf]
    %v500 = vld [vmem:[%s485 + $0x38] sm:$0xf]
    %v501 = vld [vmem:[%s485 + $0x3c] sm:$0xf]
    %v502 = vld [vmem:[%s4 + $0x3] sm:$0x1]
    %v503 = vlaneseq
    %v504 = vshrl.u32 %v503, 7
    %v505 = vsub.s32 0, %v504
    %v506 = vrot.slane %v502, %v505
    %v523 = vunpack.c.l.b16 %v486
    %v524 = vunpack.c.l.b16 %v487
    %v525 = vunpack.c.l.b16 %v488
    %v526 = vunpack.c.l.b16 %v489
    %v527 = vunpack.c.l.b16 %v490
    %v528 = vunpack.c.l.b16 %v491
    %v529 = vunpack.c.l.b16 %v492
    %v530 = vunpack.c.l.b16 %v493
    %v531 = vunpack.c.l.b16 %v494
    %v532 = vunpack.c.l.b16 %v495
    %v533 = vunpack.c.l.b16 %v496
    %v534 = vunpack.c.l.b16 %v497
    %v535 = vunpack.c.l.b16 %v498
    %v536 = vunpack.c.l.b16 %v499
    %v537 = vunpack.c.l.b16 %v500
    %v538 = vunpack.c.l.b16 %v501
    %v539 = vpack.c.b16 %v524, %v523
    %v540 = vpack.c.b16 %v526, %v525
    %v541 = vpack.c.b16 %v528, %v527
    %v542 = vpack.c.b16 %v530, %v529
    %v543 = vpack.c.b16 %v532, %v531
    %v544 = vpack.c.b16 %v534, %v533
    %v545 = vpack.c.b16 %v536, %v535
    %v546 = vpack.c.b16 %v538, %v537
    %555 = vmatprep.subr.bf16.mxu0 0
    %556 = vmatpush1.bf16.msra.mxu0 %v546
    %557 = vmatprep.subr.bf16.mxu0 0
    %558 = vmatpush1.bf16.msra.mxu0 %v545
    %559 = vmatprep.subr.bf16.mxu0 0
    %560 = vmatpush1.bf16.msra.mxu0 %v544
    %561 = vmatprep.subr.bf16.mxu0 0
    %562 = vmatpush1.bf16.msra.mxu0 %v543
    %563 = vmatprep.subr.bf16.mxu0 0
    %564 = vmatpush1.bf16.msra.mxu0 %v542
    %565 = vmatprep.subr.bf16.mxu0 0
    %566 = vmatpush1.bf16.msra.mxu0 %v541
    %567 = vmatprep.subr.bf16.mxu0 0
    %568 = vmatpush1.bf16.msra.mxu0 %v540
    %569 = vmatprep.subr.bf16.mxu0 0
    %570 = vmatpush1.bf16.msra.mxu0 %v539
    %571 = vmatprep.subr.bf16.mxu0 0
    %572 = vmatpush2.bf16.msra.mxu0 0
    %573 = vmatprep.subr.bf16.mxu0 0
    %574 = vmatpush2.bf16.msra.mxu0 0
    %575 = vmatprep.subr.bf16.mxu0 0
    %576 = vmatpush2.bf16.msra.mxu0 0
    %577 = vmatprep.subr.bf16.mxu0 0
    %578 = vmatpush2.bf16.msra.mxu0 0
    %579 = vmatprep.subr.bf16.mxu0 0
    %580 = vmatpush2.bf16.msra.mxu0 0
    %581 = vmatprep.subr.bf16.mxu0 0
    %582 = vmatpush2.bf16.msra.mxu0 0
    %583 = vmatprep.subr.bf16.mxu0 0
    %584 = vmatpush2.bf16.msra.mxu0 0
    %585 = vmatprep.subr.bf16.mxu0 0
    %586 = vmatpush2.bf16.msra.mxu0 0
    %587 = vmatprep.mubr.bf16.mxu0 0
    %588 = vmatmul.mubr.bf16.gmra.mxu0 %v481
    %v589 = vpop.f32.mrf.mxu0
    %v590 = vadd.f32 %v506, %v589
    %v591 = vpop.f32.mrf.mxu0
    %v592 = vpop.f32.mrf.mxu0
    %v593 = vadd.f32 %v506, %v592
    %v594 = vpop.f32.mrf.mxu0
    %595 = vmatprep.mubr.bf16.mxu0 0
    %596 = vmatmul.mubr.bf16.gmra.mxu0 %v482
    %v597 = vpop.f32.mrf.mxu0
    %v598 = vadd.f32 %v506, %v597
    %v599 = vpop.f32.mrf.mxu0
    %v600 = vpop.f32.mrf.mxu0
    %v601 = vadd.f32 %v506, %v600
    %v602 = vpop.f32.mrf.mxu0
    %603 = vmatprep.mubr.bf16.mxu0 0
    %604 = vmatmul.mubr.bf16.gmra.mxu0 %v483
    %v605 = vpop.f32.mrf.mxu0
    %v606 = vadd.f32 %v506, %v605
    %v607 = vpop.f32.mrf.mxu0
    %v608 = vpop.f32.mrf.mxu0
    %v609 = vadd.f32 %v506, %v608
    %v610 = vpop.f32.mrf.mxu0
    %611 = vmatprep.mubr.bf16.mxu0 0
    %612 = vmatmul.mubr.bf16.gmra.mxu0 %v484
    %v613 = vpop.f32.mrf.mxu0
    %v614 = vadd.f32 %v506, %v613
    %v615 = vpop.f32.mrf.mxu0
    %v616 = vpop.f32.mrf.mxu0
    %v617 = vadd.f32 %v506, %v616
    %v618 = vpop.f32.mrf.mxu0
    %619 = vdwg.mxu0
    %v620 = vmax.f32 %v590, 0.0
    %v621 = vmax.f32 %v593, 0.0
    %v622 = vmax.f32 %v598, 0.0
    %v623 = vmax.f32 %v601, 0.0
    %v624 = vmax.f32 %v606, 0.0
    %v625 = vmax.f32 %v609, 0.0
    %v626 = vmax.f32 %v614, 0.0
    %v627 = vmax.f32 %v617, 0.0
    %v628 = vpack.c.bf16 %v621, %v620
    %v629 = vpack.c.bf16 %v623, %v622
    %v630 = vpack.c.bf16 %v625, %v624
    %v631 = vpack.c.bf16 %v627, %v626
    %s632 = scalar_lea.vmem [#allocation2], 192
    %v633 = vld [vmem:[%s632] sm:$0xf]
    %v634 = vld [vmem:[%s632 + $0x4] sm:$0xf]
    %v635 = vld [vmem:[%s632 + $0x8] sm:$0xf]
    %v636 = vld [vmem:[%s632 + $0xc] sm:$0xf]
    %v637 = vld [vmem:[%s632 + $0x10] sm:$0xf]
    %v638 = vld [vmem:[%s632 + $0x14] sm:$0xf]
    %v639 = vld [vmem:[%s632 + $0x18] sm:$0xf]
    %v640 = vld [vmem:[%s632 + $0x1c] sm:$0xf]
    %v641 = vld [vmem:[%s632 + $0x20] sm:$0xf]
    %v642 = vld [vmem:[%s632 + $0x24] sm:$0xf]
    %v643 = vld [vmem:[%s632 + $0x28] sm:$0xf]
    %v644 = vld [vmem:[%s632 + $0x2c] sm:$0xf]
    %v645 = vld [vmem:[%s632 + $0x30] sm:$0xf]
    %v646 = vld [vmem:[%s632 + $0x34] sm:$0xf]
    %v647 = vld [vmem:[%s632 + $0x38] sm:$0xf]
    %v648 = vld [vmem:[%s632 + $0x3c] sm:$0xf]
    %v649 = vld [vmem:[%s4 + $0x4] sm:$0x1]
    %v650 = vlaneseq
    %v651 = vshrl.u32 %v650, 7
    %v652 = vsub.s32 0, %v651
    %v653 = vrot.slane %v649, %v652
    %v670 = vunpack.c.l.b16 %v633
    %v671 = vunpack.c.l.b16 %v634
    %v672 = vunpack.c.l.b16 %v635
    %v673 = vunpack.c.l.b16 %v636
    %v674 = vunpack.c.l.b16 %v637
    %v675 = vunpack.c.l.b16 %v638
    %v676 = vunpack.c.l.b16 %v639
    %v677 = vunpack.c.l.b16 %v640
    %v678 = vunpack.c.l.b16 %v641
    %v679 = vunpack.c.l.b16 %v642
    %v680 = vunpack.c.l.b16 %v643
    %v681 = vunpack.c.l.b16 %v644
    %v682 = vunpack.c.l.b16 %v645
    %v683 = vunpack.c.l.b16 %v646
    %v684 = vunpack.c.l.b16 %v647
    %v685 = vunpack.c.l.b16 %v648
    %v686 = vpack.c.b16 %v671, %v670
    %v687 = vpack.c.b16 %v673, %v672
    %v688 = vpack.c.b16 %v675, %v674
    %v689 = vpack.c.b16 %v677, %v676
    %v690 = vpack.c.b16 %v679, %v678
    %v691 = vpack.c.b16 %v681, %v680
    %v692 = vpack.c.b16 %v683, %v682
    %v693 = vpack.c.b16 %v685, %v684
    %702 = vmatprep.subr.bf16.mxu0 0
    %703 = vmatpush1.bf16.msra.mxu0 %v693
    %704 = vmatprep.subr.bf16.mxu0 0
    %705 = vmatpush1.bf16.msra.mxu0 %v692
    %706 = vmatprep.subr.bf16.mxu0 0
    %707 = vmatpush1.bf16.msra.mxu0 %v691
    %708 = vmatprep.subr.bf16.mxu0 0
    %709 = vmatpush1.bf16.msra.mxu0 %v690
    %710 = vmatprep.subr.bf16.mxu0 0
    %711 = vmatpush1.bf16.msra.mxu0 %v689
    %712 = vmatprep.subr.bf16.mxu0 0
    %713 = vmatpush1.bf16.msra.mxu0 %v688
    %714 = vmatprep.subr.bf16.mxu0 0
    %715 = vmatpush1.bf16.msra.mxu0 %v687
    %716 = vmatprep.subr.bf16.mxu0 0
    %717 = vmatpush1.bf16.msra.mxu0 %v686
    %718 = vmatprep.subr.bf16.mxu0 0
    %719 = vmatpush2.bf16.msra.mxu0 0
    %720 = vmatprep.subr.bf16.mxu0 0
    %721 = vmatpush2.bf16.msra.mxu0 0
    %722 = vmatprep.subr.bf16.mxu0 0
    %723 = vmatpush2.bf16.msra.mxu0 0
    %724 = vmatprep.subr.bf16.mxu0 0
    %725 = vmatpush2.bf16.msra.mxu0 0
    %726 = vmatprep.subr.bf16.mxu0 0
    %727 = vmatpush2.bf16.msra.mxu0 0
    %728 = vmatprep.subr.bf16.mxu0 0
    %729 = vmatpush2.bf16.msra.mxu0 0
    %730 = vmatprep.subr.bf16.mxu0 0
    %731 = vmatpush2.bf16.msra.mxu0 0
    %732 = vmatprep.subr.bf16.mxu0 0
    %733 = vmatpush2.bf16.msra.mxu0 0
    %734 = vmatprep.mubr.bf16.mxu0 0
    %735 = vmatmul.mubr.bf16.gmra.mxu0 %v628
    %v736 = vpop.f32.mrf.mxu0
    %v737 = vadd.f32 %v653, %v736
    %v738 = vpop.f32.mrf.mxu0
    %v739 = vpop.f32.mrf.mxu0
    %v740 = vadd.f32 %v653, %v739
    %v741 = vpop.f32.mrf.mxu0
    %742 = vmatprep.mubr.bf16.mxu0 0
    %743 = vmatmul.mubr.bf16.gmra.mxu0 %v629
    %v744 = vpop.f32.mrf.mxu0
    %v745 = vadd.f32 %v653, %v744
    %v746 = vpop.f32.mrf.mxu0
    %v747 = vpop.f32.mrf.mxu0
    %v748 = vadd.f32 %v653, %v747
    %v749 = vpop.f32.mrf.mxu0
    %750 = vmatprep.mubr.bf16.mxu0 0
    %751 = vmatmul.mubr.bf16.gmra.mxu0 %v630
    %v752 = vpop.f32.mrf.mxu0
    %v753 = vadd.f32 %v653, %v752
    %v754 = vpop.f32.mrf.mxu0
    %v755 = vpop.f32.mrf.mxu0
    %v756 = vadd.f32 %v653, %v755
    %v757 = vpop.f32.mrf.mxu0
    %758 = vmatprep.mubr.bf16.mxu0 0
    %759 = vmatmul.mubr.bf16.gmra.mxu0 %v631
    %v760 = vpop.f32.mrf.mxu0
    %v761 = vadd.f32 %v653, %v760
    %v762 = vpop.f32.mrf.mxu0
    %v763 = vpop.f32.mrf.mxu0
    %v764 = vadd.f32 %v653, %v763
    %v765 = vpop.f32.mrf.mxu0
    %766 = vdwg.mxu0
    %v767 = vmax.f32 %v737, 0.0
    %v768 = vmax.f32 %v740, 0.0
    %v769 = vmax.f32 %v745, 0.0
    %v770 = vmax.f32 %v748, 0.0
    %v771 = vmax.f32 %v753, 0.0
    %v772 = vmax.f32 %v756, 0.0
    %v773 = vmax.f32 %v761, 0.0
    %v774 = vmax.f32 %v764, 0.0
    %v775 = vpack.c.bf16 %v768, %v767
    %v776 = vpack.c.bf16 %v770, %v769
    %v777 = vpack.c.bf16 %v772, %v771
    %v778 = vpack.c.bf16 %v774, %v773
    %v779 = vld [vmem:[#allocation5] sm:$0xf]
    %v780 = vld [vmem:[#allocation5 + $0x4] sm:$0xf]
    %v781 = vld [vmem:[#allocation5 + $0x8] sm:$0xf]
    %v782 = vld [vmem:[#allocation5 + $0xc] sm:$0xf]
    %v783 = vld [vmem:[#allocation5 + $0x10] sm:$0xf]
    %v784 = vld [vmem:[#allocation5 + $0x14] sm:$0xf]
    %v785 = vld [vmem:[#allocation5 + $0x18] sm:$0xf]
    %v786 = vld [vmem:[#allocation5 + $0x1c] sm:$0xf]
    %v787 = vld [vmem:[#allocation5 + $0x20] sm:$0xf]
    %v788 = vld [vmem:[#allocation5 + $0x24] sm:$0xf]
    %v789 = vld [vmem:[#allocation5 + $0x28] sm:$0xf]
    %v790 = vld [vmem:[#allocation5 + $0x2c] sm:$0xf]
    %v791 = vld [vmem:[#allocation5 + $0x30] sm:$0xf]
    %v792 = vld [vmem:[#allocation5 + $0x34] sm:$0xf]
    %v793 = vld [vmem:[#allocation5 + $0x38] sm:$0xf]
    %v794 = vld [vmem:[#allocation5 + $0x3c] sm:$0xf]
    %v795 = vld [vmem:[%s5] sm:$0x1]
    %v797 = vlaneseq
    %v798 = vshrl.u32 %v797, 7
    %v799 = vsub.s32 0, %v798
    %v800 = vrot.slane %v795, %v799
    %v818 = vunpack.c.l.b16 %v779
    %v819 = vunpack.c.l.b16 %v780
    %v820 = vunpack.c.l.b16 %v781
    %v821 = vunpack.c.l.b16 %v782
    %v822 = vunpack.c.l.b16 %v783
    %v823 = vunpack.c.l.b16 %v784
    %v824 = vunpack.c.l.b16 %v785
    %v825 = vunpack.c.l.b16 %v786
    %v826 = vunpack.c.l.b16 %v787
    %v827 = vunpack.c.l.b16 %v788
    %v828 = vunpack.c.l.b16 %v789
    %v829 = vunpack.c.l.b16 %v790
    %v830 = vunpack.c.l.b16 %v791
    %v831 = vunpack.c.l.b16 %v792
    %v832 = vunpack.c.l.b16 %v793
    %v833 = vunpack.c.l.b16 %v794
    %v834 = vpack.c.b16 %v819, %v818
    %v835 = vpack.c.b16 %v821, %v820
    %v836 = vpack.c.b16 %v823, %v822
    %v837 = vpack.c.b16 %v825, %v824
    %v838 = vpack.c.b16 %v827, %v826
    %v839 = vpack.c.b16 %v829, %v828
    %v840 = vpack.c.b16 %v831, %v830
    %v841 = vpack.c.b16 %v833, %v832
    %850 = vmatprep.subr.bf16.mxu0 0
    %851 = vmatpush1.bf16.msra.mxu0 %v841
    %852 = vmatprep.subr.bf16.mxu0 0
    %853 = vmatpush1.bf16.msra.mxu0 %v840
    %854 = vmatprep.subr.bf16.mxu0 0
    %855 = vmatpush1.bf16.msra.mxu0 %v839
    %856 = vmatprep.subr.bf16.mxu0 0
    %857 = vmatpush1.bf16.msra.mxu0 %v838
    %858 = vmatprep.subr.bf16.mxu0 0
    %859 = vmatpush1.bf16.msra.mxu0 %v837
    %860 = vmatprep.subr.bf16.mxu0 0
    %861 = vmatpush1.bf16.msra.mxu0 %v836
    %862 = vmatprep.subr.bf16.mxu0 0
    %863 = vmatpush1.bf16.msra.mxu0 %v835
    %864 = vmatprep.subr.bf16.mxu0 0
    %865 = vmatpush1.bf16.msra.mxu0 %v834
    %866 = vmatprep.subr.bf16.mxu0 0
    %867 = vmatpush2.bf16.msra.mxu0 0
    %868 = vmatprep.subr.bf16.mxu0 0
    %869 = vmatpush2.bf16.msra.mxu0 0
    %870 = vmatprep.subr.bf16.mxu0 0
    %871 = vmatpush2.bf16.msra.mxu0 0
    %872 = vmatprep.subr.bf16.mxu0 0
    %873 = vmatpush2.bf16.msra.mxu0 0
    %874 = vmatprep.subr.bf16.mxu0 0
    %875 = vmatpush2.bf16.msra.mxu0 0
    %876 = vmatprep.subr.bf16.mxu0 0
    %877 = vmatpush2.bf16.msra.mxu0 0
    %878 = vmatprep.subr.bf16.mxu0 0
    %879 = vmatpush2.bf16.msra.mxu0 0
    %880 = vmatprep.subr.bf16.mxu0 0
    %881 = vmatpush2.bf16.msra.mxu0 0
    %882 = vmatprep.mubr.bf16.mxu0 0
    %883 = vmatmul.mubr.bf16.gmra.mxu0 %v775
    %v884 = vpop.f32.mrf.mxu0
    %v885 = vadd.f32 %v800, %v884
    %v886 = vpop.f32.mrf.mxu0
    %v887 = vpop.f32.mrf.mxu0
    %v888 = vadd.f32 %v800, %v887
    %v889 = vpop.f32.mrf.mxu0
    %890 = vmatprep.mubr.bf16.mxu0 0
    %891 = vmatmul.mubr.bf16.gmra.mxu0 %v776
    %v892 = vpop.f32.mrf.mxu0
    %v893 = vadd.f32 %v800, %v892
    %v894 = vpop.f32.mrf.mxu0
    %v895 = vpop.f32.mrf.mxu0
    %v896 = vadd.f32 %v800, %v895
    %v897 = vpop.f32.mrf.mxu0
    %898 = vmatprep.mubr.bf16.mxu0 0
    %899 = vmatmul.mubr.bf16.gmra.mxu0 %v777
    %v900 = vpop.f32.mrf.mxu0
    %v901 = vadd.f32 %v800, %v900
    %v902 = vpop.f32.mrf.mxu0
    %v903 = vpop.f32.mrf.mxu0
    %v904 = vadd.f32 %v800, %v903
    %v905 = vpop.f32.mrf.mxu0
    %906 = vmatprep.mubr.bf16.mxu0 0
    %907 = vmatmul.mubr.bf16.gmra.mxu0 %v778
    %v908 = vpop.f32.mrf.mxu0
    %v909 = vadd.f32 %v800, %v908
    %v910 = vpop.f32.mrf.mxu0
    %v911 = vpop.f32.mrf.mxu0
    %v912 = vadd.f32 %v800, %v911
    %v913 = vpop.f32.mrf.mxu0
    %914 = vdwg.mxu0
    %915 = vst [vmem:[#allocation7] sm:$0xff] %v885
    %916 = vst [vmem:[#allocation7 + $0x8] sm:$0xff] %v888
    %917 = vst [vmem:[#allocation7 + $0x10] sm:$0xff] %v893
    %918 = vst [vmem:[#allocation7 + $0x18] sm:$0xff] %v896
    %919 = vst [vmem:[#allocation7 + $0x20] sm:$0xff] %v901
    %920 = vst [vmem:[#allocation7 + $0x28] sm:$0xff] %v904
    %921 = vst [vmem:[#allocation7 + $0x30] sm:$0xff] %v909
    %922 = vst [vmem:[#allocation7 + $0x38] sm:$0xff] %v912
    // Predicated region
    $region34: #{tpu_custom_call.1} parent=1 // pred_check
      _
    $region35: #{tpu_custom_call.1} parent=1 // pred_check_branch
      %924 = sbr.rel (0) target = $region37
    $region36: #{tpu_custom_call.1} parent=1 // pred_region
      %s926 = ssub.s32 1024, 1024
      %927 = vsyncadd [#allocation4], %s926
      %s928 = sshll.u32 [#allocation7], 4
      %s929 = int_to_ptr.vmem [resolvable:$true] %s928
      %934 = dma.vmem_to_hbm [thread:$0]  %s929, 1024, %s6, [#allocation4], 128, 128, 8
    $region37: #{tpu_custom_call.1} parent=1 // pred_fallthru
      _
    // Predicated region
    $region38: #{tpu_custom_call.1} parent=1 // pred_check
      _
    $region39: #{tpu_custom_call.1} parent=1 // pred_check_branch
      %936 = sbr.rel (0) target = $region41
    $region40: #{tpu_custom_call.1} parent=1 // pred_region
      %937 = dma.done [#allocation4], 1024
    $region41: #{tpu_custom_call.1} parent=1 // pred_fallthru
      _
    %938 = vsyncpa [#allocation3], 1
    %939 = vsyncpa [#allocation6], 1
    %940 = vsyncpa [#allocation4], 1

</llo_original>
